<compile_context>
chip_gen: v7x
topology: tpu7x:2x2x1
jax: 0.10.0
libtpu: 0.0.40
codegen_flags: <defaults>
</compile_context>

<pallas_src>
import math

import jax
import jax.numpy as jnp
from jax.experimental import pallas as pl
from jax.experimental.pallas import tpu as pltpu


def _standardize_kernel(h_ref, params_ref, o_ref):
    """Elementwise hot path: (h - mean) * inv_std with featurewise broadcast."""
    h = h_ref[...].astype(jnp.float32)       # (tile_n, F_packed), promoted to f32
    p = params_ref[...]                      # (2, F_packed), f32
    mean = p[0:1, :]                         # (1, F_packed) -> broadcasts over rows
    inv_std = p[1:2, :]                      # (1, F_packed)
    o_ref[...] = ((h - mean) * inv_std).astype(o_ref.dtype)


def _choose_tile_n(f_packed: int, dtype_bytes: int, n_packed_rows: int) -> int:
    """Pick the node-tile height (in packed rows).

    Keeps the double-buffered (input + output) working set comfortably inside
    the scoped-VMEM budget on all generations (v5e: 16 MiB default scoped,
    v6e: 32/128 MiB, v7x: 32/64 MiB).
    """
    try:
        vmem = pltpu.get_tpu_info().vmem_capacity_bytes
    except Exception:
        vmem = 64 << 20  # conservative fallback (v7x physical per-TC)

    # Whole pipelined working set target: min(1/8 of VMEM, 8 MiB).
    budget = min(vmem // 8, 8 << 20)
    # 2 double-buffered input tiles + 2 double-buffered output tiles.
    tile_bytes = max(budget // 4, 8 * f_packed * dtype_bytes)
    tile_n = tile_bytes // (f_packed * dtype_bytes)
    tile_n = max(8, (tile_n // 8) * 8)       # sublane aligned
    tile_n = min(tile_n, 2048)               # diminishing returns beyond ~1-2K rows

    # Don't pick a tile taller than the (sublane-rounded) problem itself.
    n_rows = max(8, ((n_packed_rows + 7) // 8) * 8)
    return min(tile_n, n_rows)


def standardize(atom_features: jax.Array,
                mean: jax.Array,
                std: jax.Array) -> jax.Array:
    """(h - mean) / std over the node axis, featurewise mean/std.

    atom_features: (N, F)   (any float dtype)
    mean, std:     (F,)     (featurewise parameters)
    """
    n, f = atom_features.shape
    out_dtype = atom_features.dtype
    dtype_bytes = jnp.dtype(out_dtype).itemsize

    # ---- lane-dense packing: fold r nodes into the lane dim so (r*F) % 128 == 0
    r = 1 if f % 128 == 0 else (128 // math.gcd(f, 128))
    f_packed = r * f

    tile_n = _choose_tile_n(f_packed, dtype_bytes, pl.cdiv(n, r))

    # ---- pad node count to a whole number of (tile_n, f_packed) tiles
    rows_per_tile = tile_n * r
    n_pad = pl.cdiv(n, rows_per_tile) * rows_per_tile
    h = atom_features
    if n_pad != n:
        h = jnp.pad(h, ((0, n_pad - n), (0, 0)))
    n_packed = n_pad // r
    h_packed = h.reshape(n_packed, f_packed)

    # ---- fused (mean, inv_std) resident parameter block in f32
    mean_f32 = mean.astype(jnp.float32)
    inv_std_f32 = 1.0 / std.astype(jnp.float32)
    params = jnp.stack(
        [jnp.tile(mean_f32, r), jnp.tile(inv_std_f32, r)], axis=0)  # (2, f_packed)

    grid = (n_packed // tile_n,)

    out_packed = pl.pallas_call(
        _standardize_kernel,
        out_shape=jax.ShapeDtypeStruct((n_packed, f_packed), out_dtype),
        grid_spec=pltpu.PrefetchScalarGridSpec(
            num_scalar_prefetch=0,
            grid=grid,
            in_specs=[
                pl.BlockSpec((tile_n, f_packed), lambda i: (i, 0)),  # node tile
                pl.BlockSpec((2, f_packed), lambda i: (0, 0)),       # mean/inv_std (resident)
            ],
            out_specs=pl.BlockSpec((tile_n, f_packed), lambda i: (i, 0)),
        ),
        compiler_params=pltpu.CompilerParams(
            # Node axis is embarrassingly parallel -> megacore split on v7x,
            # neutral on v5e / v6e.
            dimension_semantics=("parallel",),
        ),
    )(h_packed, params)

    return out_packed.reshape(n_pad, f)[:n]


if __name__ == "__main__":
    key = jax.random.PRNGKey(0)
    k_h, k_m, k_s = jax.random.split(key, 3)

    num_nodes, num_features = 16, 32  # small graph: 16 atoms, 32-dim atom features

    atom_features = jax.random.normal(
        k_h, (num_nodes, num_features), dtype=jnp.float32)
    # Deterministic "registered" mean/std parameters (synthetic, featurewise).
    mean = jax.random.normal(k_m, (num_features,), dtype=jnp.float32)
    std = jax.random.uniform(k_s, (num_features,), dtype=jnp.float32,
                             minval=0.5, maxval=2.0)

    out = standardize(atom_features, mean, std)
    out = jax.block_until_ready(out)

    # Reference check against plain JAX broadcast semantics (matches PyTorch).
    ref = (atom_features - mean[None, :]) / std[None, :]
    assert out.shape == atom_features.shape
    assert jnp.allclose(out, ref, atol=1e-6, rtol=1e-5)

    print("KERNEL_OK")
</pallas_src>

<mosaic_0001>
module attributes {stable_mosaic.version = 11 : i64} {
  func.func @_standardize_kernel(%arg0: i32, %arg1: memref<8x128xf32, #tpu.memory_space<vmem>>, %arg2: memref<2x128xf32, #tpu.memory_space<vmem>>, %arg3: memref<8x128xf32, #tpu.memory_space<vmem>>) attributes {dimension_semantics = [#tpu.dimension_semantics<parallel>], iteration_bounds = array<i64: 1>, scalar_prefetch = 0 : i64, scratch_operands = 0 : i64, tpu.core_type = #tpu.core_type<tc>, window_params = [{transform_indices = @transform_0, window_bounds = array<i64: 8, 128>}, {pipeline_mode = #tpu.pipeline_mode<synchronous>, transform_indices = @transform_1, window_bounds = array<i64: 2, 128>}, {transform_indices = @transform_2, window_bounds = array<i64: 8, 128>}]} {
    %c0 = arith.constant 0 : index
    %c0_0 = arith.constant 0 : index
    %0 = vector.load %arg1[%c0, %c0_0] : memref<8x128xf32, #tpu.memory_space<vmem>>, vector<8x128xf32>
    %c0_1 = arith.constant 0 : index
    %c0_2 = arith.constant 0 : index
    %1 = vector.load %arg2[%c0_1, %c0_2] : memref<2x128xf32, #tpu.memory_space<vmem>>, vector<2x128xf32>
    %2 = vector.extract_strided_slice %1 {offsets = [0, 0], sizes = [1, 128], strides = [1, 1]} : vector<2x128xf32> to vector<1x128xf32>
    %3 = vector.extract_strided_slice %1 {offsets = [1, 0], sizes = [1, 128], strides = [1, 1]} : vector<2x128xf32> to vector<1x128xf32>
    %4 = vector.broadcast %2 : vector<1x128xf32> to vector<8x128xf32>
    %5 = arith.subf %0, %4 : vector<8x128xf32>
    %6 = vector.broadcast %3 : vector<1x128xf32> to vector<8x128xf32>
    %7 = arith.mulf %5, %6 : vector<8x128xf32>
    %c0_3 = arith.constant 0 : index
    %c0_4 = arith.constant 0 : index
    %8 = vector.load %arg3[%c0_3, %c0_4] : memref<8x128xf32, #tpu.memory_space<vmem>>, vector<8x128xf32>
    tpu.vector_store %arg3[%c0_3, %c0_4], %7 {strides = array<i32>} : memref<8x128xf32, #tpu.memory_space<vmem>>, vector<8x128xf32>,
    return
  }
  func.func @transform_0(%arg0: i32) -> (i32, i32) {
    %c0_i32 = arith.constant 0 : i32
    %c0_i32_0 = arith.constant 0 : i32
    return %arg0, %c0_i32 : i32, i32
  }
  func.func @transform_1(%arg0: i32) -> (i32, i32) {
    %c0_i32 = arith.constant 0 : i32
    %c0_i32_0 = arith.constant 0 : i32
    %c0_i32_1 = arith.constant 0 : i32
    return %c0_i32, %c0_i32_0 : i32, i32
  }
  func.func @transform_2(%arg0: i32) -> (i32, i32) {
    %c0_i32 = arith.constant 0 : i32
    %c0_i32_0 = arith.constant 0 : i32
    return %arg0, %c0_i32 : i32, i32
  }
}

</mosaic_0001>

<llo_original>
// kernel: tpu_custom_call.1
$region0: #{tpu_custom_call.1}
  #allocation0 [shape = 'u32[]', space=smem, size = 0x4, offset = 0x4, fixed_abs, tag = 'smem constant byte address 0x4 - core index']
  #allocation1 [shape = 'u32[144,128]{1,0:T(1,128)}', space=vmem, size = 0x12000, scoped, tag = 'internal scratch']
  %s0 = inlined_call_operand.hbm [shape: f32[8,128], index: 0, kind: input, shape index: {}]
  %s1 = inlined_call_operand.vmem [shape: f32[2,128], index: 1, kind: input, shape index: {}]
  %s2 = inlined_call_operand.hbm [shape: f32[8,128], index: 2, kind: output, shape index: {}]
  %s3 = sld [smem:[#allocation0]]
  $region22: #{tpu_custom_call.1} parent=0
    _
  %s5 = ssub.s32 1, %s3
  %s6 = scalar_select 0, %s5, %s3
  $region1: #{tpu_custom_call.1} parent=0
    #allocation2 [shape = 'u8[4096]{0}', space=vmem, size = 0x1000, scoped, tag = 'input window, operand 0, single buffered']
    #allocation3 [shape = 's32[1]{0}', space=sflag, size = 0x4, scoped, tag = 'scoped memory for tpu_custom_call.1']
    #allocation4 [shape = 's32[1]{0}', space=sflag, size = 0x4, scoped, tag = 'scoped memory for tpu_custom_call.1']
    #allocation5 [shape = 'u8[4096]{0}', space=vmem, size = 0x1000, scoped, tag = 'output window, operand 0, single buffered']
    %7 = vsyncpa [#allocation3], 0
    %8 = vsyncpa [#allocation4], 0
    // Predicated region
    $region2: #{tpu_custom_call.1} parent=1 // pred_check
      _
    $region3: #{tpu_custom_call.1} parent=1 // pred_check_branch
      %10 = sbr.rel (0) target = $region5
    $region4: #{tpu_custom_call.1} parent=1 // pred_region
      %s12 = ssub.s32 128, 128
      %13 = vsyncadd [#allocation3], %s12
      %s15 = sshll.u32 [#allocation2], 4
      %s16 = int_to_ptr.vmem [resolvable:$true] %s15
      %18 = dma.hbm_to_vmem [thread:$0]  %s0, 128, %s16, [#allocation3]
    $region5: #{tpu_custom_call.1} parent=1 // pred_fallthru
      _
    // Predicated region
    $region6: #{tpu_custom_call.1} parent=1 // pred_check
      _
    $region7: #{tpu_custom_call.1} parent=1 // pred_check_branch
      %20 = sbr.rel (0) target = $region9
    $region8: #{tpu_custom_call.1} parent=1 // pred_region
      _
    $region9: #{tpu_custom_call.1} parent=1 // pred_fallthru
      _
    // Predicated region
    $region10: #{tpu_custom_call.1} parent=1 // pred_check
      _
    $region11: #{tpu_custom_call.1} parent=1 // pred_check_branch
      %22 = sbr.rel (0) target = $region13
    $region12: #{tpu_custom_call.1} parent=1 // pred_region
      %23 = dma.done [#allocation3], 128
    $region13: #{tpu_custom_call.1} parent=1 // pred_fallthru
      _
    %v24 = vld [vmem:[#allocation2] sm:$0xff]
    %v25 = vld [vmem:[%s1] sm:$0x3]
    %v26 = vlaneseq
    %v27 = vshrl.u32 %v26, 7
    %v28 = vsub.s32 0, %v27
    %v29 = vrot.slane %v25, %v28
    %v30 = vsub.f32 %v24, %v29
    %v31 = vlaneseq
    %v32 = vshrl.u32 %v31, 7
    %v33 = vsub.s32 1, %v32
    %v34 = vrot.slane %v25, %v33
    %v35 = vmul.f32 %v30, %v34
    %36 = vst [vmem:[#allocation5] sm:$0xff] %v35
    // Predicated region
    $region14: #{tpu_custom_call.1} parent=1 // pred_check
      _
    $region15: #{tpu_custom_call.1} parent=1 // pred_check_branch
      %38 = sbr.rel (0) target = $region17
    $region16: #{tpu_custom_call.1} parent=1 // pred_region
      %s40 = ssub.s32 128, 128
      %41 = vsyncadd [#allocation4], %s40
      %s43 = sshll.u32 [#allocation5], 4
      %s44 = int_to_ptr.vmem [resolvable:$true] %s43
      %46 = dma.vmem_to_hbm [thread:$0]  %s44, 128, %s2, [#allocation4]
    $region17: #{tpu_custom_call.1} parent=1 // pred_fallthru
      _
    // Predicated region
    $region18: #{tpu_custom_call.1} parent=1 // pred_check
      _
    $region19: #{tpu_custom_call.1} parent=1 // pred_check_branch
      %48 = sbr.rel (0) target = $region21
    $region20: #{tpu_custom_call.1} parent=1 // pred_region
      %49 = dma.done [#allocation4], 128
    $region21: #{tpu_custom_call.1} parent=1 // pred_fallthru
      _
    %50 = vsyncpa [#allocation3], 1
    %51 = vsyncpa [#allocation4], 1

</llo_original>
